<compile_context>
chip_gen: v6e
topology: v6e:2x2x1
jax: 0.10.0
libtpu: 0.0.40
codegen_flags: <defaults>
</compile_context>

<pallas_src>
import jax
import jax.numpy as jnp
from jax.experimental import pallas as pl
from jax.experimental.pallas import tpu as pltpu

EPS = 1e-6
_MiB = 1024 * 1024


# ----------------------------------------------------------------------------
# Helpers
# ----------------------------------------------------------------------------
def _round_up(n, m):
    return (n + m - 1) // m * m


def _sublane(itemsize):
    # f32 -> 8 rows per packed tile, bf16 -> 16, int8/fp8 -> 32
    return max(8, 32 // max(1, int(itemsize)))


def _choose_row_tile(m, row_bytes, requested, n_bufs, sub):
    """Largest row tile (multiple of `sub`) such that `n_bufs` double-buffered
    tiles stay under a conservative cross-chip VMEM budget (24 MiB)."""
    budget = 24 * _MiB
    cap = max(sub, (budget // max(1, n_bufs * row_bytes)) // sub * sub)
    tile = max(sub, (min(requested, cap) // sub) * sub)
    if m <= tile:
        tile = _round_up(m, sub)
    return tile, _round_up(m, tile)


def _vmem_limit(per_step_bytes):
    # double-buffered pipeline + headroom, clamped to [32 MiB, 64 MiB] so the
    # same setting is safe on v5e/v6e (128 MiB physical) and v7x (64 MiB).
    return int(min(64 * _MiB, max(32 * _MiB, 3 * per_step_bytes)))


# ----------------------------------------------------------------------------
# Kernels
# ----------------------------------------------------------------------------
def _layernorm_kernel(x_ref, a_ref, b_ref, o_ref):
    x = x_ref[...].astype(jnp.float32)
    h = x.shape[-1]
    mean = jnp.mean(x, axis=-1, keepdims=True)
    d = x - mean
    # torch.Tensor.std default is unbiased (divisor H-1); eps is added to std.
    var = jnp.sum(d * d, axis=-1, keepdims=True) * (1.0 / (h - 1))
    inv = pl.reciprocal(jnp.sqrt(var) + EPS, approx=True)  # one per row, on EUP
    y = a_ref[...].astype(jnp.float32) * (d * inv) + b_ref[...].astype(jnp.float32)
    o_ref[...] = y.astype(o_ref.dtype)


def _add_kernel(x_ref, y_ref, o_ref):
    # dropout in eval mode is identity -> plain residual add
    o_ref[...] = x_ref[...] + y_ref[...]


def _fused_ln_linear_residual_kernel(x_ref, a_ref, b_ref, w_ref, o_ref):
    # out = x + LayerNorm(x) @ W   (dropout = eval-mode identity)
    x = x_ref[...].astype(jnp.float32)
    h = x.shape[-1]
    mean = jnp.mean(x, axis=-1, keepdims=True)
    d = x - mean
    var = jnp.sum(d * d, axis=-1, keepdims=True) * (1.0 / (h - 1))
    inv = pl.reciprocal(jnp.sqrt(var) + EPS, approx=True)
    normed = a_ref[...].astype(jnp.float32) * (d * inv) + b_ref[...].astype(jnp.float32)
    y = jnp.dot(normed.astype(w_ref.dtype), w_ref[...],
                preferred_element_type=jnp.float32)
    o_ref[...] = (x + y).astype(o_ref.dtype)


# ----------------------------------------------------------------------------
# Pallas wrappers
# ----------------------------------------------------------------------------
def _layernorm_pallas(x2d, a_2, b_2, *, tile_m=512):
    m, h = x2d.shape
    itemsize = x2d.dtype.itemsize
    sub = _sublane(itemsize)
    tile, m_pad = _choose_row_tile(m, h * itemsize, tile_m, n_bufs=4, sub=sub)
    xp = jnp.pad(x2d, ((0, m_pad - m), (0, 0))) if m_pad != m else x2d
    a2 = a_2.reshape(1, h)
    b2 = b_2.reshape(1, h)
    per_step = (2 * tile * h + 2 * h) * itemsize
    out = pl.pallas_call(
        _layernorm_kernel,
        out_shape=jax.ShapeDtypeStruct((m_pad, h), x2d.dtype),
        grid_spec=pltpu.PrefetchScalarGridSpec(
            num_scalar_prefetch=0,
            grid=(m_pad // tile,),
            in_specs=[
                pl.BlockSpec((tile, h), lambda i: (i, 0)),
                pl.BlockSpec((1, h), lambda i: (0, 0)),
                pl.BlockSpec((1, h), lambda i: (0, 0)),
            ],
            out_specs=pl.BlockSpec((tile, h), lambda i: (i, 0)),
        ),
        compiler_params=pltpu.CompilerParams(
            dimension_semantics=("parallel",),
            vmem_limit_bytes=_vmem_limit(per_step),
        ),
    )(xp, a2, b2)
    return out[:m] if m_pad != m else out


def _residual_pallas(x, y, *, tile_rows=1024, lane_cols=512):
    """out = x + y on a lane-dense (rows, lane_cols) view; out aliases x's buffer."""
    shape, dtype = x.shape, x.dtype
    total = x.size
    itemsize = dtype.itemsize
    sub = _sublane(itemsize)
    rows = (total + lane_cols - 1) // lane_cols
    tile, rows_pad = _choose_row_tile(rows, lane_cols * itemsize, tile_rows,
                                      n_bufs=6, sub=sub)
    padded = rows_pad * lane_cols
    xf = jnp.pad(x.reshape(-1), (0, padded - total)).reshape(rows_pad, lane_cols)
    yf = jnp.pad(y.reshape(-1), (0, padded - total)).reshape(rows_pad, lane_cols)
    per_step = 3 * tile * lane_cols * itemsize
    out = pl.pallas_call(
        _add_kernel,
        out_shape=jax.ShapeDtypeStruct((rows_pad, lane_cols), dtype),
        grid_spec=pltpu.PrefetchScalarGridSpec(
            num_scalar_prefetch=0,
            grid=(rows_pad // tile,),
            in_specs=[
                pl.BlockSpec((tile, lane_cols), lambda i: (i, 0)),
                pl.BlockSpec((tile, lane_cols), lambda i: (i, 0)),
            ],
            out_specs=pl.BlockSpec((tile, lane_cols), lambda i: (i, 0)),
        ),
        compiler_params=pltpu.CompilerParams(
            dimension_semantics=("parallel",),
            vmem_limit_bytes=_vmem_limit(per_step),
        ),
        input_output_aliases={0: 0},  # reuse x's HBM buffer for the output
    )(xf, yf)
    return out.reshape(-1)[:total].reshape(shape)


def sublayer_connection(x, sublayer, a_2, b_2, *, tile_m=512):
    """Generic path: x + dropout(sublayer(LayerNorm(x))) for an arbitrary JAX
    `sublayer` callable. LN and the residual add run as Pallas kernels."""
    shape = x.shape
    h = shape[-1]
    x2d = x.reshape(-1, h)
    normed = _layernorm_pallas(x2d, a_2, b_2, tile_m=tile_m).reshape(shape)
    y = sublayer(normed)
    # TODO(synk): training-mode dropout (pltpu.prng_*) not implemented; p is inert at eval.
    return _residual_pallas(x, y)


def sublayer_connection_fused_linear(x, w, a_2, b_2, *, tile_m=512):
    """Fully fused path for a linear (bias-free) sublayer:
    one kernel computing x + LayerNorm(x) @ w, with w: [H, H]."""
    shape = x.shape
    h = shape[-1]
    x2d = x.reshape(-1, h)
    m = x2d.shape[0]
    itemsize = x2d.dtype.itemsize
    sub = _sublane(itemsize)
    tile, m_pad = _choose_row_tile(m, h * itemsize, tile_m, n_bufs=4, sub=sub)
    xp = jnp.pad(x2d, ((0, m_pad - m), (0, 0))) if m_pad != m else x2d
    a2 = a_2.reshape(1, h)
    b2 = b_2.reshape(1, h)
    per_step = (2 * tile * h + 2 * h) * itemsize + w.size * w.dtype.itemsize
    # TODO(synk): if H is large enough that the (H, H) weight no longer fits VMEM,
    # tile the matmul N/K dims (256-wide on v6e/v7x MXU, 128 on v5e).
    out = pl.pallas_call(
        _fused_ln_linear_residual_kernel,
        out_shape=jax.ShapeDtypeStruct((m_pad, h), x2d.dtype),
        grid_spec=pltpu.PrefetchScalarGridSpec(
            num_scalar_prefetch=0,
            grid=(m_pad // tile,),
            in_specs=[
                pl.BlockSpec((tile, h), lambda i: (i, 0)),
                pl.BlockSpec((1, h), lambda i: (0, 0)),
                pl.BlockSpec((1, h), lambda i: (0, 0)),
                pl.BlockSpec((h, h), lambda i: (0, 0)),  # weight resident in VMEM
            ],
            out_specs=pl.BlockSpec((tile, h), lambda i: (i, 0)),
        ),
        compiler_params=pltpu.CompilerParams(
            dimension_semantics=("parallel",),
            vmem_limit_bytes=_vmem_limit(per_step),
        ),
        input_output_aliases={0: 0},  # output reuses x's HBM buffer
    )(xp, a2, b2, w)
    out = out[:m] if m_pad != m else out
    return out.reshape(shape)


# ----------------------------------------------------------------------------
# Demo / correctness check
# ----------------------------------------------------------------------------
if __name__ == "__main__":
    B, S, H = 2, 8, 32
    key = jax.random.PRNGKey(0)
    kx, kw = jax.random.split(key)

    x = jax.random.normal(kx, (B, S, H), dtype=jnp.float32)

    # LayerNorm parameters (nn.Parameter(ones/zeros) init)
    a_2 = jnp.ones((H,), dtype=jnp.float32)
    b_2 = jnp.zeros((H,), dtype=jnp.float32)

    # Demo sublayer: deterministic linear layer.
    w = jax.random.normal(kw, (H, H), dtype=jnp.float32) * 0.02

    def sublayer(z):
        return jnp.einsum("bsh,hk->bsk", z, w)

    # Reference in plain JAX (same unbiased-std LayerNorm semantics as torch).
    mean = jnp.mean(x, axis=-1, keepdims=True)
    d = x - mean
    std = jnp.sqrt(jnp.sum(d * d, axis=-1, keepdims=True) / (H - 1))
    normed_ref = a_2 * d / (std + EPS) + b_2
    ref = x + sublayer(normed_ref)

    # Path 1: fully fused LN -> linear -> +x kernel (demo sublayer is linear).
    fused_fn = jax.jit(lambda xx: sublayer_connection_fused_linear(xx, w, a_2, b_2))
    out_fused = jax.block_until_ready(fused_fn(x))

    # Path 2: generic callable path (LN kernel + JAX sublayer + residual kernel).
    generic_fn = jax.jit(lambda xx: sublayer_connection(xx, sublayer, a_2, b_2))
    out_generic = jax.block_until_ready(generic_fn(x))

    # approx reciprocal in the LN normalization -> slightly looser tolerance
    assert jnp.allclose(out_fused, ref, atol=5e-3, rtol=5e-3), "fused path mismatch"
    assert jnp.allclose(out_generic, ref, atol=5e-3, rtol=5e-3), "generic path mismatch"

    print("KERNEL_OK")
</pallas_src>

<mosaic_0001>
module attributes {stable_mosaic.version = 11 : i64} {
  func.func @_fused_ln_linear_residual_kernel(%arg0: i32, %arg1: memref<16x32xf32, #tpu.memory_space<vmem>>, %arg2: memref<1x32xf32, #tpu.memory_space<vmem>>, %arg3: memref<1x32xf32, #tpu.memory_space<vmem>>, %arg4: memref<32x32xf32, #tpu.memory_space<vmem>>, %arg5: memref<16x32xf32, #tpu.memory_space<vmem>>) attributes {dimension_semantics = [#tpu.dimension_semantics<parallel>], iteration_bounds = array<i64: 1>, scalar_prefetch = 0 : i64, scratch_operands = 0 : i64, tpu.core_type = #tpu.core_type<tc>, window_params = [{transform_indices = @transform_0, window_bounds = array<i64: 16, 32>}, {pipeline_mode = #tpu.pipeline_mode<synchronous>, transform_indices = @transform_1, window_bounds = array<i64: 1, 32>}, {pipeline_mode = #tpu.pipeline_mode<synchronous>, transform_indices = @transform_2, window_bounds = array<i64: 1, 32>}, {pipeline_mode = #tpu.pipeline_mode<synchronous>, transform_indices = @transform_3, window_bounds = array<i64: 32, 32>}, {transform_indices = @transform_4, window_bounds = array<i64: 16, 32>}]} {
    %c0 = arith.constant 0 : index
    %c0_0 = arith.constant 0 : index
    %0 = vector.load %arg1[%c0, %c0_0] : memref<16x32xf32, #tpu.memory_space<vmem>>, vector<16x32xf32>
    %cst = arith.constant dense<0.000000e+00> : vector<16xf32>
    %1 = vector.multi_reduction <add>, %0, %cst [1] : vector<16x32xf32> to vector<16xf32>
    %2 = vector.shape_cast %1 : vector<16xf32> to vector<16x1xf32>
    %cst_1 = arith.constant 3.200000e+01 : f32
    %3 = vector.broadcast %cst_1 : f32 to vector<16x1xf32>
    %4 = arith.divf %2, %3 : vector<16x1xf32>
    %5 = vector.broadcast %4 : vector<16x1xf32> to vector<16x32xf32>
    %6 = arith.subf %0, %5 : vector<16x32xf32>
    %7 = arith.mulf %6, %6 : vector<16x32xf32>
    %cst_2 = arith.constant dense<0.000000e+00> : vector<16xf32>
    %8 = vector.multi_reduction <add>, %7, %cst_2 [1] : vector<16x32xf32> to vector<16xf32>
    %9 = vector.shape_cast %8 : vector<16xf32> to vector<16x1xf32>
    %cst_3 = arith.constant 0.0322580636 : f32
    %10 = vector.broadcast %cst_3 : f32 to vector<16x1xf32>
    %11 = arith.mulf %9, %10 : vector<16x1xf32>
    %12 = math.sqrt %11 : vector<16x1xf32>
    %cst_4 = arith.constant 9.99999997E-7 : f32
    %13 = vector.broadcast %cst_4 : f32 to vector<16x1xf32>
    %14 = arith.addf %12, %13 : vector<16x1xf32>
    %15 = tpu.reciprocal %14 {approx = true} : vector<16x1xf32> -> vector<16x1xf32>
    %c0_5 = arith.constant 0 : index
    %c0_6 = arith.constant 0 : index
    %16 = vector.load %arg2[%c0_5, %c0_6] : memref<1x32xf32, #tpu.memory_space<vmem>>, vector<1x32xf32>
    %17 = vector.broadcast %15 : vector<16x1xf32> to vector<16x32xf32>
    %18 = arith.mulf %6, %17 : vector<16x32xf32>
    %19 = vector.broadcast %16 : vector<1x32xf32> to vector<16x32xf32>
    %20 = arith.mulf %19, %18 : vector<16x32xf32>
    %c0_7 = arith.constant 0 : index
    %c0_8 = arith.constant 0 : index
    %21 = vector.load %arg3[%c0_7, %c0_8] : memref<1x32xf32, #tpu.memory_space<vmem>>, vector<1x32xf32>
    %22 = vector.broadcast %21 : vector<1x32xf32> to vector<16x32xf32>
    %23 = arith.addf %20, %22 : vector<16x32xf32>
    %c0_9 = arith.constant 0 : index
    %c0_10 = arith.constant 0 : index
    %24 = vector.load %arg4[%c0_9, %c0_10] : memref<32x32xf32, #tpu.memory_space<vmem>>, vector<32x32xf32>
    %cst_11 = arith.constant dense<0.000000e+00> : vector<16x32xf32>
    %25 = tpu.matmul %23, %24, %cst_11 {dimension_numbers = #tpu.dot_dimension_numbers<[1], [0], [0], [1], [0, 0, 1, 1], [], []>} : vector<16x32xf32>, vector<32x32xf32>, vector<16x32xf32> -> vector<16x32xf32>
    %26 = arith.addf %0, %25 : vector<16x32xf32>
    %c0_12 = arith.constant 0 : index
    %c0_13 = arith.constant 0 : index
    %27 = vector.load %arg5[%c0_12, %c0_13] : memref<16x32xf32, #tpu.memory_space<vmem>>, vector<16x32xf32>
    tpu.vector_store %arg5[%c0_12, %c0_13], %26 {strides = array<i32>} : memref<16x32xf32, #tpu.memory_space<vmem>>, vector<16x32xf32>,
    return
  }
  func.func @transform_0(%arg0: i32) -> (i32, i32) {
    %c0_i32 = arith.constant 0 : i32
    %c0_i32_0 = arith.constant 0 : i32
    return %arg0, %c0_i32 : i32, i32
  }
  func.func @transform_1(%arg0: i32) -> (i32, i32) {
    %c0_i32 = arith.constant 0 : i32
    %c0_i32_0 = arith.constant 0 : i32
    %c0_i32_1 = arith.constant 0 : i32
    return %c0_i32, %c0_i32_0 : i32, i32
  }
  func.func @transform_2(%arg0: i32) -> (i32, i32) {
    %c0_i32 = arith.constant 0 : i32
    %c0_i32_0 = arith.constant 0 : i32
    %c0_i32_1 = arith.constant 0 : i32
    return %c0_i32, %c0_i32_0 : i32, i32
  }
  func.func @transform_3(%arg0: i32) -> (i32, i32) {
    %c0_i32 = arith.constant 0 : i32
    %c0_i32_0 = arith.constant 0 : i32
    %c0_i32_1 = arith.constant 0 : i32
    return %c0_i32, %c0_i32_0 : i32, i32
  }
  func.func @transform_4(%arg0: i32) -> (i32, i32) {
    %c0_i32 = arith.constant 0 : i32
    %c0_i32_0 = arith.constant 0 : i32
    return %arg0, %c0_i32 : i32, i32
  }
}

</mosaic_0001>

<llo_original>
// kernel: _lambda_.1
$region0: #{_lambda_.1}
  #allocation0 [shape = 'u32[]', space=smem, size = 0x4, offset = 0x4, fixed_abs, tag = 'smem constant byte address 0x4 - core index']
  #allocation1 [shape = 'u32[144,128]{1,0:T(1,128)}', space=vmem, size = 0x12000, scoped, tag = 'internal scratch']
  %s0 = inlined_call_operand.vmem [shape: f32[16,32], index: 0, kind: input, shape index: {}, may-alias: {0,4}]
  %s1 = inlined_call_operand.vmem [shape: f32[1,32], index: 1, kind: input, shape index: {}]
  %s2 = inlined_call_operand.vmem [shape: f32[1,32], index: 2, kind: input, shape index: {}]
  %s3 = inlined_call_operand.hbm [shape: f32[32,32], index: 3, kind: input, shape index: {}]
  %s4 = inlined_call_operand.vmem [shape: f32[16,32], index: 4, kind: output, shape index: {}, may-alias: {0,4}]
  %s5 = sld [smem:[#allocation0]]
  $region30: #{_lambda_.1} parent=0
    _
  %s7 = ssub.s32 1, %s5
  %s8 = scalar_select 0, %s7, %s5
  $region1: #{_lambda_.1} parent=0
    #allocation2 [shape = 'u8[16384]{0}', space=vmem, size = 0x4000, scoped, tag = 'input window, operand 3, single buffered']
    #allocation3 [shape = 's32[1]{0}', space=sflag, size = 0x4, scoped, tag = 'scoped memory for _lambda_.1']
    %9 = vsyncpa [#allocation3], 0
    // Predicated region
    $region2: #{_lambda_.1} parent=1 // pred_check
      _
    $region3: #{_lambda_.1} parent=1 // pred_check_branch
      %11 = sbr.rel (0) target = $region5
    $region4: #{_lambda_.1} parent=1 // pred_region
      _
    $region5: #{_lambda_.1} parent=1 // pred_fallthru
      _
    // Predicated region
    $region6: #{_lambda_.1} parent=1 // pred_check
      _
    $region7: #{_lambda_.1} parent=1 // pred_check_branch
      %13 = sbr.rel (0) target = $region9
    $region8: #{_lambda_.1} parent=1 // pred_region
      _
    $region9: #{_lambda_.1} parent=1 // pred_fallthru
      _
    // Predicated region
    $region10: #{_lambda_.1} parent=1 // pred_check
      _
    $region11: #{_lambda_.1} parent=1 // pred_check_branch
      %15 = sbr.rel (0) target = $region13
    $region12: #{_lambda_.1} parent=1 // pred_region
      _
    $region13: #{_lambda_.1} parent=1 // pred_fallthru
      _
    // Predicated region
    $region14: #{_lambda_.1} parent=1 // pred_check
      _
    $region15: #{_lambda_.1} parent=1 // pred_check_branch
      %17 = sbr.rel (0) target = $region17
    $region16: #{_lambda_.1} parent=1 // pred_region
      %s19 = ssub.s32 512, 512
      %20 = vsyncadd [#allocation3], %s19
      %s21 = sshll.u32 [#allocation2], 4
      %s22 = int_to_ptr.vmem [resolvable:$true] %s21
      %27 = dma.hbm_to_vmem [thread:$0]  %s3, 512, %s22, [#allocation3], 128, 128, 8
    $region17: #{_lambda_.1} parent=1 // pred_fallthru
      _
    // Predicated region
    $region18: #{_lambda_.1} parent=1 // pred_check
      _
    $region19: #{_lambda_.1} parent=1 // pred_check_branch
      %29 = sbr.rel (0) target = $region21
    $region20: #{_lambda_.1} parent=1 // pred_region
      %30 = dma.done [#allocation3], 512
    $region21: #{_lambda_.1} parent=1 // pred_fallthru
      _
    %v31 = vld [vmem:[%s0] sm:$0xff]
    %v32 = vld [vmem:[%s0 + $0x8] sm:$0xff]
    %vm33 = vcmask 261120
    %v34 = vsel %vm33, %v31, 0.0
    %35 = vadd.xlane.f32.xlu0 %v34
    %v36 = vpop.xlane.xlu0 %35
    %v37 = vsel %vm33, %v32, 0.0
    %38 = vadd.xlane.f32.xlu0 %v37
    %v39 = vpop.xlane.xlu0 %38
    %v40 = vrcp.pop 32.0
    %v41 = vmul.f32 %v36, %v40
    %v42 = vmul.f32 %v39, %v40
    %v43 = vsub.f32 %v31, %v41
    %v44 = vsub.f32 %v32, %v42
    %v45 = vmul.f32 %v43, %v43
    %v46 = vmul.f32 %v44, %v44
    %v47 = vsel %vm33, %v45, 0.0
    %48 = vadd.xlane.f32.xlu0 %v47
    %v49 = vpop.xlane.xlu0 %48
    %v50 = vsel %vm33, %v46, 0.0
    %51 = vadd.xlane.f32.xlu0 %v50
    %v52 = vpop.xlane.xlu0 %51
    %v53 = vmul.f32 %v49, 0.032258064
    %v54 = vmul.f32 %v52, 0.032258064
    %v55 = vrsqrt.pop %v53
    %v56 = vmul.f32 %v53, %v55
    %vm57 = vcmp.eq.f32.partialorder %v53, inf
    %v58 = vsel %vm57, %v53, %v56
    %vm59 = vcmp.eq.f32.partialorder %v53, 0.0
    %v60 = vand.u32 %v53, 2147483648
    %v61 = vsel %vm59, %v60, %v58
    %v62 = vrsqrt.pop %v54
    %v63 = vmul.f32 %v54, %v62
    %vm64 = vcmp.eq.f32.partialorder %v54, inf
    %v65 = vsel %vm64, %v54, %v63
    %vm66 = vcmp.eq.f32.partialorder %v54, 0.0
    %v67 = vand.u32 %v54, 2147483648
    %v68 = vsel %vm66, %v67, %v65
    %v69 = vadd.f32 %v61, 1e-06
    %v70 = vadd.f32 %v68, 1e-06
    %v71 = vrcp.pop %v69
    %v72 = vrcp.pop %v70
    %v73 = vld [vmem:[%s1] sm:$0x1]
    %v74 = vmul.f32 %v43, %v71
    %v75 = vmul.f32 %v44, %v72
    %v77 = vlaneseq
    %v78 = vshrl.u32 %v77, 7
    %v79 = vsub.s32 0, %v78
    %v80 = vrot.slane %v73, %v79
    %v82 = vmul.f32 %v80, %v74
    %v83 = vmul.f32 %v80, %v75
    %v84 = vld [vmem:[%s2] sm:$0x1]
    %v86 = vlaneseq
    %v87 = vshrl.u32 %v86, 7
    %v88 = vsub.s32 0, %v87
    %v89 = vrot.slane %v84, %v88
    %v91 = vadd.f32 %v82, %v89
    %v92 = vadd.f32 %v83, %v89
    %v93 = vld [vmem:[#allocation2] sm:$0xff]
    %v94 = vld [vmem:[#allocation2 + $0x8] sm:$0xff]
    %v95 = vld [vmem:[#allocation2 + $0x10] sm:$0xff]
    %v96 = vld [vmem:[#allocation2 + $0x18] sm:$0xff]
    %v98 = vsel %vm33, %v91, 0
    %v101 = vsel %vm33, %v92, 0
    %103 = vmatprep.subr.mxu0 0.0
    %104 = vmatpush1.msra.mxu0 0.0
    %105 = vmatprep.subr.mxu0 0.0
    %106 = vmatpush1.msra.mxu0 0.0
    %107 = vmatprep.subr.mxu0 0.0
    %108 = vmatpush1.msra.mxu0 0.0
    %109 = vmatprep.subr.mxu0 0.0
    %110 = vmatpush1.msra.mxu0 0.0
    %111 = vmatprep.subr.mxu0 0.0
    %112 = vmatpush1.msra.mxu0 0.0
    %113 = vmatprep.subr.mxu0 0.0
    %114 = vmatpush1.msra.mxu0 0.0
    %115 = vmatprep.subr.mxu0 0.0
    %116 = vmatpush1.msra.mxu0 0.0
    %117 = vmatprep.subr.mxu0 0.0
    %118 = vmatpush1.msra.mxu0 0.0
    %119 = vmatprep.subr.mxu0 0.0
    %120 = vmatpush1.msra.mxu0 0.0
    %121 = vmatprep.subr.mxu0 0.0
    %122 = vmatpush1.msra.mxu0 0.0
    %123 = vmatprep.subr.mxu0 0.0
    %124 = vmatpush1.msra.mxu0 0.0
    %125 = vmatprep.subr.mxu0 0.0
    %126 = vmatpush1.msra.mxu0 0.0
    %127 = vmatprep.subr.mxu0 0.0
    %128 = vmatpush1.msra.mxu0 %v96
    %129 = vmatprep.subr.mxu0 0.0
    %130 = vmatpush1.msra.mxu0 %v95
    %131 = vmatprep.subr.mxu0 0.0
    %132 = vmatpush1.msra.mxu0 %v94
    %133 = vmatprep.subr.mxu0 0.0
    %134 = vmatpush1.msra.mxu0 %v93
    %135 = vmatprep.subr.mxu0 0.0
    %136 = vmatpush2.msra.mxu0 0.0
    %137 = vmatprep.subr.mxu0 0.0
    %138 = vmatpush2.msra.mxu0 0.0
    %139 = vmatprep.subr.mxu0 0.0
    %140 = vmatpush2.msra.mxu0 0.0
    %141 = vmatprep.subr.mxu0 0.0
    %142 = vmatpush2.msra.mxu0 0.0
    %143 = vmatprep.subr.mxu0 0.0
    %144 = vmatpush2.msra.mxu0 0.0
    %145 = vmatprep.subr.mxu0 0.0
    %146 = vmatpush2.msra.mxu0 0.0
    %147 = vmatprep.subr.mxu0 0.0
    %148 = vmatpush2.msra.mxu0 0.0
    %149 = vmatprep.subr.mxu0 0.0
    %150 = vmatpush2.msra.mxu0 0.0
    %151 = vmatprep.subr.mxu0 0.0
    %152 = vmatpush2.msra.mxu0 0.0
    %153 = vmatprep.subr.mxu0 0.0
    %154 = vmatpush2.msra.mxu0 0.0
    %155 = vmatprep.subr.mxu0 0.0
    %156 = vmatpush2.msra.mxu0 0.0
    %157 = vmatprep.subr.mxu0 0.0
    %158 = vmatpush2.msra.mxu0 0.0
    %159 = vmatprep.subr.mxu0 0.0
    %160 = vmatpush2.msra.mxu0 0.0
    %161 = vmatprep.subr.mxu0 0.0
    %162 = vmatpush2.msra.mxu0 0.0
    %163 = vmatprep.subr.mxu0 0.0
    %164 = vmatpush2.msra.mxu0 0.0
    %165 = vmatprep.subr.mxu0 0.0
    %166 = vmatpush2.msra.mxu0 0.0
    %167 = vmatprep.mubr.f32.mxu0 0.0
    %168 = vmatmul.mubr.f32.gmra.mxu0 %v98
    %v169 = vpop.f32.mrf.mxu0
    %v170 = vadd.f32 0.0, %v169
    %v171 = vpop.f32.mrf.mxu0
    %172 = vmatprep.mubr.f32.mxu0 0.0
    %173 = vmatmul.mubr.f32.gmra.mxu0 %v101
    %v174 = vpop.f32.mrf.mxu0
    %v175 = vadd.f32 0.0, %v174
    %v176 = vpop.f32.mrf.mxu0
    %177 = vdwg.mxu0
    %v178 = vadd.f32 %v31, %v170
    %v179 = vadd.f32 %v32, %v175
    %180 = vst.msk [vmem:[%s4] sm:$0xff] %vm33, %v178
    %181 = vst.msk [vmem:[%s4 + $0x8] sm:$0xff] %vm33, %v179
    // Predicated region
    $region22: #{_lambda_.1} parent=1 // pred_check
      _
    $region23: #{_lambda_.1} parent=1 // pred_check_branch
      %183 = sbr.rel (0) target = $region25
    $region24: #{_lambda_.1} parent=1 // pred_region
      _
    $region25: #{_lambda_.1} parent=1 // pred_fallthru
      _
    // Predicated region
    $region26: #{_lambda_.1} parent=1 // pred_check
      _
    $region27: #{_lambda_.1} parent=1 // pred_check_branch
      %185 = sbr.rel (0) target = $region29
    $region28: #{_lambda_.1} parent=1 // pred_region
      _
    $region29: #{_lambda_.1} parent=1 // pred_fallthru
      _
    %186 = vsyncpa [#allocation3], 1

</llo_original>
